<compile_context>
chip_gen: v6e
topology: v6e:2x2x1
jax: 0.10.0
libtpu: 0.0.40
codegen_flags: <defaults>
</compile_context>

<pallas_src>
import functools

import jax
import jax.numpy as jnp
from jax.experimental import pallas as pl
from jax.experimental.pallas import tpu as pltpu


def _scale_kernel(x_ref, o_ref, *, scale):
    # scale is a compile-time Python float closed over at trace time.
    o_ref[...] = (x_ref[...] * scale).astype(o_ref.dtype)


def _choose_lanes(n_elem: int) -> int:
    """Widest lane count (multiple of 128) that divides n_elem; 0 if none."""
    for lanes in (4096, 2048, 1024, 512, 256, 128):
        if n_elem % lanes == 0:
            return lanes
    return 0


def scale_forward(x: jax.Array, scale: float = 0.125) -> jax.Array:
    """Computes scale * x with a Pallas TPU kernel. x is NCHW (or any shape)."""
    orig_shape = x.shape
    dtype = x.dtype
    n_elem = x.size
    itemsize = jnp.dtype(dtype).itemsize
    # Packed sublanes per vreg: 8 for f32, 16 for bf16/f16, 32 for int8/fp8.
    sublane_pack = max(8, 32 // itemsize)

    lanes = _choose_lanes(n_elem)
    pad = 0
    x_flat = x.reshape(-1)
    if lanes == 0:
        # Fallback (only when n_elem is not a multiple of 128): pad the flat
        # length to a full (sublane_pack, 128) tile, strip afterwards.
        lanes = 128
        tile_elems = sublane_pack * lanes
        pad = (-n_elem) % tile_elems
        x_flat = jnp.pad(x_flat, (0, pad))

    rows = x_flat.size // lanes
    x2d = x_flat.reshape(rows, lanes)

    # Row-tile sized for ~2 MiB blocks: with double buffering that is
    # 2*(2 MiB in) + 2*(2 MiB out) = 8 MiB, under every generation's default
    # scoped-VMEM limit (16 MiB v5e, 32 MiB v6e/v7x).
    target_tile_bytes = 2 * 1024 * 1024
    tr_max = max(1, target_tile_bytes // (lanes * itemsize))
    if rows <= tr_max or rows <= sublane_pack:
        tr = rows  # single full-height block (block dim == array dim is legal)
    else:
        tr = (min(rows, tr_max) // sublane_pack) * sublane_pack
        tr = max(tr, sublane_pack)

    grid = (pl.cdiv(rows, tr),)

    cost = pl.CostEstimate(
        flops=n_elem,
        transcendentals=0,
        bytes_accessed=2 * n_elem * itemsize,
    )

    kernel = functools.partial(_scale_kernel, scale=float(scale))

    out2d = pl.pallas_call(
        kernel,
        out_shape=jax.ShapeDtypeStruct((rows, lanes), dtype),
        grid_spec=pltpu.PrefetchScalarGridSpec(
            num_scalar_prefetch=0,
            grid=grid,
            in_specs=[pl.BlockSpec((tr, lanes), lambda i: (i, 0))],
            out_specs=pl.BlockSpec((tr, lanes), lambda i: (i, 0)),
        ),
        compiler_params=pltpu.CompilerParams(
            dimension_semantics=("parallel",),
        ),
        cost_estimate=cost,
    )(x2d)

    out_flat = out2d.reshape(-1)
    if pad:
        out_flat = out_flat[:n_elem]
    return out_flat.reshape(orig_shape)


if __name__ == "__main__":
    key = jax.random.PRNGKey(0)
    # Small NCHW input consistent with a conv-net feature map.
    x = jax.random.normal(key, (2, 4, 16, 16), dtype=jnp.float32)

    scale = 0.125
    y = scale_forward(x, scale=scale)
    jax.block_until_ready(y)

    # Correctness check against the reference semantics: y = scale * x.
    ref = scale * x
    assert y.shape == x.shape and y.dtype == x.dtype
    assert jnp.allclose(y, ref, atol=1e-6, rtol=1e-6)

    print("KERNEL_OK")
</pallas_src>

<mosaic_0001>
module attributes {stable_mosaic.version = 11 : i64} {
  func.func @_scale_kernel(%arg0: i32, %arg1: memref<1x2048xf32, #tpu.memory_space<vmem>>, %arg2: memref<1x2048xf32, #tpu.memory_space<vmem>>) attributes {dimension_semantics = [#tpu.dimension_semantics<parallel>], iteration_bounds = array<i64: 1>, scalar_prefetch = 0 : i64, scratch_operands = 0 : i64, tpu.core_type = #tpu.core_type<tc>, window_params = [{transform_indices = @transform_0, window_bounds = array<i64: 1, 2048>}, {transform_indices = @transform_1, window_bounds = array<i64: 1, 2048>}]} {
    %c0 = arith.constant 0 : index
    %c0_0 = arith.constant 0 : index
    %0 = vector.load %arg1[%c0, %c0_0] : memref<1x2048xf32, #tpu.memory_space<vmem>>, vector<1x2048xf32>
    %cst = arith.constant 1.250000e-01 : f32
    %1 = vector.broadcast %cst : f32 to vector<1x2048xf32>
    %2 = arith.mulf %0, %1 : vector<1x2048xf32>
    %c0_1 = arith.constant 0 : index
    %c0_2 = arith.constant 0 : index
    %3 = vector.load %arg2[%c0_1, %c0_2] : memref<1x2048xf32, #tpu.memory_space<vmem>>, vector<1x2048xf32>
    tpu.vector_store %arg2[%c0_1, %c0_2], %2 {strides = array<i32>} : memref<1x2048xf32, #tpu.memory_space<vmem>>, vector<1x2048xf32>,
    return
  }
  func.func @transform_0(%arg0: i32) -> (i32, i32) {
    %c0_i32 = arith.constant 0 : i32
    %c0_i32_0 = arith.constant 0 : i32
    return %arg0, %c0_i32 : i32, i32
  }
  func.func @transform_1(%arg0: i32) -> (i32, i32) {
    %c0_i32 = arith.constant 0 : i32
    %c0_i32_0 = arith.constant 0 : i32
    return %arg0, %c0_i32 : i32, i32
  }
}

</mosaic_0001>

<llo_original>
// kernel: tpu_custom_call.1
$region0: #{tpu_custom_call.1}
  #allocation0 [shape = 'u32[]', space=smem, size = 0x4, offset = 0x4, fixed_abs, tag = 'smem constant byte address 0x4 - core index']
  #allocation1 [shape = 'u32[144,128]{1,0:T(1,128)}', space=vmem, size = 0x12000, scoped, tag = 'internal scratch']
  %s0 = inlined_call_operand.hbm [shape: f32[1,2048], index: 0, kind: input, shape index: {}]
  %s1 = inlined_call_operand.hbm [shape: f32[1,2048], index: 1, kind: output, shape index: {}]
  %s2 = sld [smem:[#allocation0]]
  $region18: #{tpu_custom_call.1} parent=0
    _
  %s4 = ssub.s32 1, %s2
  %s5 = scalar_select 0, %s4, %s2
  $region1: #{tpu_custom_call.1} parent=0
    #allocation2 [shape = 'u8[8192]{0}', space=vmem, size = 0x2000, scoped, tag = 'input window, operand 0, single buffered']
    #allocation3 [shape = 's32[1]{0}', space=sflag, size = 0x4, scoped, tag = 'scoped memory for tpu_custom_call.1']
    #allocation4 [shape = 's32[1]{0}', space=sflag, size = 0x4, scoped, tag = 'scoped memory for tpu_custom_call.1']
    #allocation5 [shape = 'u8[8192]{0}', space=vmem, size = 0x2000, scoped, tag = 'output window, operand 0, single buffered']
    %6 = vsyncpa [#allocation3], 0
    %7 = vsyncpa [#allocation4], 0
    // Predicated region
    $region2: #{tpu_custom_call.1} parent=1 // pred_check
      _
    $region3: #{tpu_custom_call.1} parent=1 // pred_check_branch
      %9 = sbr.rel (0) target = $region5
    $region4: #{tpu_custom_call.1} parent=1 // pred_region
      %s11 = ssub.s32 256, 256
      %12 = vsyncadd [#allocation3], %s11
      %s14 = sshll.u32 [#allocation2], 4
      %s15 = int_to_ptr.vmem [resolvable:$true] %s14
      %17 = dma.hbm_to_vmem [thread:$0]  %s0, 256, %s15, [#allocation3]
    $region5: #{tpu_custom_call.1} parent=1 // pred_fallthru
      _
    // Predicated region
    $region6: #{tpu_custom_call.1} parent=1 // pred_check
      _
    $region7: #{tpu_custom_call.1} parent=1 // pred_check_branch
      %19 = sbr.rel (0) target = $region9
    $region8: #{tpu_custom_call.1} parent=1 // pred_region
      %20 = dma.done [#allocation3], 256
    $region9: #{tpu_custom_call.1} parent=1 // pred_fallthru
      _
    %v21 = vld [vmem:[#allocation2] sm:$0xff]
    %v22 = vld [vmem:[#allocation2 + $0x8] sm:$0xff]
    %v23 = vmul.f32 %v21, 0.125
    %v24 = vmul.f32 %v22, 0.125
    %25 = vst [vmem:[#allocation5] sm:$0xff] %v23
    %26 = vst [vmem:[#allocation5 + $0x8] sm:$0xff] %v24
    // Predicated region
    $region10: #{tpu_custom_call.1} parent=1 // pred_check
      _
    $region11: #{tpu_custom_call.1} parent=1 // pred_check_branch
      %28 = sbr.rel (0) target = $region13
    $region12: #{tpu_custom_call.1} parent=1 // pred_region
      %s30 = ssub.s32 256, 256
      %31 = vsyncadd [#allocation4], %s30
      %s33 = sshll.u32 [#allocation5], 4
      %s34 = int_to_ptr.vmem [resolvable:$true] %s33
      %36 = dma.vmem_to_hbm [thread:$0]  %s34, 256, %s1, [#allocation4]
    $region13: #{tpu_custom_call.1} parent=1 // pred_fallthru
      _
    // Predicated region
    $region14: #{tpu_custom_call.1} parent=1 // pred_check
      _
    $region15: #{tpu_custom_call.1} parent=1 // pred_check_branch
      %38 = sbr.rel (0) target = $region17
    $region16: #{tpu_custom_call.1} parent=1 // pred_region
      %39 = dma.done [#allocation4], 256
    $region17: #{tpu_custom_call.1} parent=1 // pred_fallthru
      _
    %40 = vsyncpa [#allocation3], 1
    %41 = vsyncpa [#allocation4], 1

</llo_original>
